<compile_context>
chip_gen: v6e
topology: v6e:2x2x1
jax: 0.10.0
libtpu: 0.0.40
codegen_flags: <defaults>
</compile_context>

<pallas_src>
import functools
import math
import random

import numpy as np
import jax
import jax.numpy as jnp
from jax.experimental import pallas as pl
from jax.experimental.pallas import tpu as pltpu


# ----------------------- hash setup (mirrors torch __init__) -----------------
def _is_prime(x):
    for i in range(2, int(math.sqrt(x))):
        if x % i == 0:
            return False
    return True


def _next_prime(n):
    while not _is_prime(n):
        n += 1
    return n


def make_hashes(num_hashes, vocab_size, num_embeds, hash_weights):
    """Exactly replicates HashEmbeddingBag.__init__ hash drawing (seed 1924031)."""
    random.seed(1924031)

    def draw_hash(N):
        p = _next_prime(random.randint(vocab_size, int(2 ** 32)))
        a, b = random.randint(1, p), random.randint(1, p)
        return (a, b, p, N)

    hashes = [draw_hash(num_embeds) for _ in range(num_hashes)]
    weight_hash = draw_hash(vocab_size) if hash_weights else None
    return hashes, weight_hash


def apply_hash(hash_, x_i64):
    a, b, p, N = hash_
    return (np.int64(a) * x_i64 + np.int64(b)) % np.int64(p) % np.int64(N)


def _round_up(x, m):
    return ((x + m - 1) // m) * m


# ------------------------------- Pallas kernel --------------------------------
def _hash_embedding_bag_kernel(hid_ref, w_ref, etab_ref, g_ref, b_ref, o_ref,
                               *, num_hashes, eps, normalize):
    """One tile of tokens: bag gather + weighted sum + LayerNorm (+ optional L2 norm)."""
    hid = hid_ref[...]                       # (TL, H) int32  hashed embedding ids
    w = w_ref[...]                           # (TL, H) f32    per-token mixing weights
    etab = etab_ref[...]                     # (E, D)  bf16   embeddings.weight (resident)
    TL = hid.shape[0]
    E = etab.shape[0]
    D = etab.shape[1]

    # Weighted one-hot gather, collapsed into a SINGLE MXU matmul:
    #   A[i, e] = sum_k w[i, k] * (hid[i, k] == e)   (f32 accumulation, one select/hash)
    #   emb     = bf16(A) @ bf16(etab)               (f32 accumulation on the MXU)
    # Hash collisions still sum correctly because the combine is additive; the only
    # rounding vs the f32 reference is the single bf16 cast of A and of the table.
    # TODO(synk): for production-size num_embeds the (E, D) table should not be
    # VMEM-resident (won't fit v7x's 64 MiB): keep it in HBM (memory_space=pl.ANY),
    # scalar-prefetch hashed ids, and double-buffer per-row DMA gathers, or chunk E
    # over an 'arbitrary' grid axis with a pl.when-initialized accumulator.
    e_iota = jax.lax.broadcasted_iota(jnp.int32, (TL, E), 1)
    a = jnp.where(e_iota == hid[:, 0:1], w[:, 0:1], 0.0)
    for k in range(1, num_hashes):           # static, small
        a = a + jnp.where(e_iota == hid[:, k:k + 1], w[:, k:k + 1], 0.0)
    emb = jnp.dot(a.astype(jnp.bfloat16), etab,
                  preferred_element_type=jnp.float32)            # (TL, D) f32

    # LayerNorm over the feature dim (norm1), fused moments: var = E[x^2] - mean^2.
    inv_d = 1.0 / D
    s1 = jnp.sum(emb, axis=-1, keepdims=True)
    s2 = jnp.sum(emb * emb, axis=-1, keepdims=True)
    mean = s1 * inv_d
    var = jnp.maximum(s2 * inv_d - mean * mean, 0.0)
    out = (emb - mean) * jax.lax.rsqrt(var + eps) * g_ref[...] + b_ref[...]

    if normalize:  # F.normalize(p=2, dim=1): clamp denom at 1e-12, rsqrt on the EUP.
        inv = jax.lax.rsqrt(jnp.maximum(jnp.sum(out * out, axis=-1, keepdims=True), 1e-24))
        out = out * inv

    o_ref[...] = out


def _vmem_capacity_bytes():
    """Chip-aware VMEM capacity (falls back to the smallest, v7x's 64 MiB/core)."""
    try:
        info = pltpu.get_tpu_info()
        cap = getattr(info, "vmem_capacity_bytes", None)
        if cap:
            return int(cap)
    except Exception:
        pass
    return 64 * 1024 * 1024


def hash_embedding_bag_pallas(hashed_ids, weight_ids, emb_w, wemb_w, gamma, beta,
                              *, eps=1e-5, normalize=False, sample_weights=None,
                              tile_rows=256):
    """Forward for the default path (offsets=None): one bag per token.

    TODO(synk): general `offsets` (variable-length bags) are not implemented;
    only the offsets=None path.  Per-sample `weights` are supported via
    `sample_weights` (applied in the wrapper, exactly as torch does).
    """
    L, H = hashed_ids.shape
    E, D = emb_w.shape

    # Mixing weights: trivial XLA row gather outside the kernel.
    w = jnp.take(wemb_w, weight_ids.reshape(-1), axis=0).astype(jnp.float32)   # (L, H)
    if sample_weights is not None:
        w = w * sample_weights.reshape(-1, 1).astype(jnp.float32)

    # bf16 MXU operand: halves resident VMEM + HBM->VMEM DMA bytes for the table.
    etab = emb_w.astype(jnp.bfloat16)

    # Token tile: large tiles amortize per-grid-step overhead and fill the 256-wide
    # MXU on v6e/v7x; clamp for tiny L to avoid gross padding.
    # TODO(synk): on v7x, pick tile_rows so the grid length is >= 2 and even, so the
    # 'parallel' axis can be split across both TensorCores.
    tile_rows = int(max(8, min(tile_rows, _round_up(L, 8))))
    L_pad = _round_up(L, tile_rows)
    if L_pad != L:
        pad = L_pad - L
        hashed_ids = jnp.pad(hashed_ids, ((0, pad), (0, 0)))
        w = jnp.pad(w, ((0, pad), (0, 0)))
    n_tiles = L_pad // tile_rows

    # VMEM budget (conservative): table (counted double-buffered even though we
    # request single-buffering), double-buffered token tiles, in-kernel (TL, E)
    # weighted-one-hot temporaries and (TL, D) f32 intermediates, plus headroom.
    needed = (2 * E * D * 2                              # bf16 table
              + 2 * tile_rows * (2 * H * 4 + D * 4)      # id/weight/out tiles
              + 3 * tile_rows * E * 4                    # iota / A temporaries
              + 4 * tile_rows * D * 4)                   # emb / LN intermediates
    vmem_cap = _vmem_capacity_bytes()
    vmem_limit = int(min(vmem_cap - 4 * 1024 * 1024,
                         max(16 * 1024 * 1024, 2 * needed)))

    kernel = functools.partial(_hash_embedding_bag_kernel,
                               num_hashes=H, eps=eps, normalize=normalize)

    # TODO(synk): the (tile_rows, H) id/weight tiles are lane-sparse (H<<128);
    # a transposed (H, L) layout (tokens on lanes) would need a transposed-LHS
    # matmul or an in-kernel transpose, so it is not adopted here.
    def run(single_buffer_consts):
        const_kw = ({"pipeline_mode": pl.Buffered(buffer_count=1)}
                    if single_buffer_consts else {})
        return pl.pallas_call(
            kernel,
            out_shape=jax.ShapeDtypeStruct((L_pad, D), jnp.float32),
            grid=(n_tiles,),
            in_specs=[
                pl.BlockSpec((tile_rows, H), lambda i: (i, 0)),   # hashed ids tile
                pl.BlockSpec((tile_rows, H), lambda i: (i, 0)),   # mixing weights tile
                pl.BlockSpec((E, D), lambda i: (0, 0), **const_kw),  # table (constant idx)
                pl.BlockSpec((1, D), lambda i: (0, 0), **const_kw),  # LayerNorm gamma
                pl.BlockSpec((1, D), lambda i: (0, 0), **const_kw),  # LayerNorm beta
            ],
            out_specs=pl.BlockSpec((tile_rows, D), lambda i: (i, 0)),
            compiler_params=pltpu.CompilerParams(
                dimension_semantics=("parallel",),
                vmem_limit_bytes=vmem_limit),
        )(hashed_ids, w, etab, gamma, beta)

    try:
        out = run(True)       # single-buffer the constant-index blocks
    except Exception:
        out = run(False)      # fallback if Buffered(1) unsupported in this build
    return out[:L]


# ---------------------------- pure-JAX references -----------------------------
def _reference_f32(hashed_ids, w, emb_w, gamma, beta, eps, normalize):
    """Natural f32 gather reference (the torch module's math)."""
    g = emb_w[hashed_ids]                                     # (L, H, D)
    e = jnp.sum(w[:, :, None] * g, axis=1)                    # (L, D)
    mean = jnp.mean(e, axis=-1, keepdims=True)
    var = jnp.mean((e - mean) ** 2, axis=-1, keepdims=True)
    out = (e - mean) * jax.lax.rsqrt(var + eps) * gamma + beta
    if normalize:
        out = out * jax.lax.rsqrt(
            jnp.maximum(jnp.sum(out * out, axis=-1, keepdims=True), 1e-24))
    return out


def _reference_kernel_numerics(hashed_ids, w, emb_w, gamma, beta, eps, normalize):
    """Mirrors the kernel's quantization path: weighted one-hot built in f32,
    cast to bf16 once, contracted against the bf16 table in (near-)f32."""
    E, D = emb_w.shape
    onehot = (hashed_ids[:, :, None] == jnp.arange(E, dtype=jnp.int32)[None, None, :]
              ).astype(jnp.float32)                                          # (L, H, E)
    a = jnp.einsum('lh,lhe->le', w, onehot, precision=jax.lax.Precision.HIGHEST)
    a = a.astype(jnp.bfloat16).astype(jnp.float32)
    etab = emb_w.astype(jnp.bfloat16).astype(jnp.float32)
    e = jnp.einsum('le,ed->ld', a, etab, precision=jax.lax.Precision.HIGHEST)
    mean = jnp.mean(e, axis=-1, keepdims=True)
    var = jnp.mean((e - mean) ** 2, axis=-1, keepdims=True)
    out = (e - mean) * jax.lax.rsqrt(var + eps) * gamma + beta
    if normalize:
        out = out * jax.lax.rsqrt(
            jnp.maximum(jnp.sum(out * out, axis=-1, keepdims=True), 1e-24))
    return out


if __name__ == "__main__":
    # Module hyper-parameters (small but consistent with the torch module).
    num_hashes = 3
    vocab_size = 1000
    embedding_dim = 128
    num_embeds = 256
    hash_weights = True
    L = 16  # number of input tokens (one bag each, since offsets=None)

    key = jax.random.PRNGKey(0)
    k_emb, k_w, k_ids = jax.random.split(key, 3)

    # Deterministic parameter init mirroring __init__:
    #   xavier_normal_ on embeddings.weight, normal(0,1) on weight_emb.weight,
    #   LayerNorm gamma=1 / beta=0.
    xavier_std = math.sqrt(2.0 / (num_embeds + embedding_dim))
    emb_w = jax.random.normal(k_emb, (num_embeds, embedding_dim), jnp.float32) * xavier_std
    wemb_w = jax.random.normal(k_w, (vocab_size, num_hashes), jnp.float32)
    gamma = jnp.ones((1, embedding_dim), jnp.float32)
    beta = jnp.zeros((1, embedding_dim), jnp.float32)

    hashes, weight_hash = make_hashes(num_hashes, vocab_size, num_embeds, hash_weights)

    # Example input ids (hash_weights=True => ids may exceed vocab_size).
    input_ids = jax.random.randint(k_ids, (L,), 0, 1_000_000, dtype=jnp.int32)

    # Host-side 64-bit modular hashing (index prep; not the hot path).
    ids64 = np.asarray(input_ids, dtype=np.int64)
    hashed_np = np.stack([apply_hash(h, ids64) for h in hashes], axis=1).astype(np.int32)
    if weight_hash is None:
        weight_np = ids64.astype(np.int32)
    else:
        weight_np = apply_hash(weight_hash, ids64).astype(np.int32)

    hashed_ids = jnp.asarray(hashed_np)                 # (L, H) int32
    weight_ids = jnp.asarray(weight_np)                 # (L,)   int32

    # Mixing weights for the references (kernel wrapper gathers them itself).
    w_mix = jnp.take(wemb_w, weight_ids, axis=0).astype(jnp.float32)   # (L, H)

    for normalize in (False, True):
        out = hash_embedding_bag_pallas(hashed_ids, weight_ids, emb_w, wemb_w,
                                        gamma, beta, eps=1e-5, normalize=normalize)
        out = jax.block_until_ready(out)
        assert out.shape == (L, embedding_dim) and out.dtype == jnp.float32

        # Tight check vs a reference that mirrors the kernel's quantization path,
        # loose check vs the full-f32 reference (bf16 rounding of w and the table,
        # amplified by LayerNorm).
        ref_q = _reference_kernel_numerics(hashed_ids, w_mix, emb_w, gamma, beta,
                                           1e-5, normalize)
        ref_f = _reference_f32(hashed_ids, w_mix, emb_w, gamma, beta, 1e-5, normalize)
        np.testing.assert_allclose(np.asarray(out), np.asarray(ref_q),
                                   rtol=1e-4, atol=1e-4)
        np.testing.assert_allclose(np.asarray(out), np.asarray(ref_f),
                                   rtol=5e-2, atol=5e-2)

    print("KERNEL_OK")
</pallas_src>

<mosaic_0001>
module attributes {stable_mosaic.version = 11 : i64} {
  func.func @_hash_embedding_bag_kernel(%arg0: i32, %arg1: memref<16x3xi32, #tpu.memory_space<vmem>>, %arg2: memref<16x3xf32, #tpu.memory_space<vmem>>, %arg3: memref<256x128xbf16, #tpu.memory_space<vmem>>, %arg4: memref<1x128xf32, #tpu.memory_space<vmem>>, %arg5: memref<1x128xf32, #tpu.memory_space<vmem>>, %arg6: memref<16x128xf32, #tpu.memory_space<vmem>>) attributes {dimension_semantics = [#tpu.dimension_semantics<parallel>], iteration_bounds = array<i64: 1>, scalar_prefetch = 0 : i64, scratch_operands = 0 : i64, tpu.core_type = #tpu.core_type<tc>, window_params = [{transform_indices = @transform_0, window_bounds = array<i64: 16, 3>}, {transform_indices = @transform_1, window_bounds = array<i64: 16, 3>}, {pipeline_mode = #tpu.pipeline_mode<synchronous>, transform_indices = @transform_2, window_bounds = array<i64: 256, 128>}, {pipeline_mode = #tpu.pipeline_mode<synchronous>, transform_indices = @transform_3, window_bounds = array<i64: 1, 128>}, {pipeline_mode = #tpu.pipeline_mode<synchronous>, transform_indices = @transform_4, window_bounds = array<i64: 1, 128>}, {transform_indices = @transform_5, window_bounds = array<i64: 16, 128>}]} {
    %c0 = arith.constant 0 : index
    %c0_0 = arith.constant 0 : index
    %0 = vector.load %arg1[%c0, %c0_0] : memref<16x3xi32, #tpu.memory_space<vmem>>, vector<16x3xi32>
    %c0_1 = arith.constant 0 : index
    %c0_2 = arith.constant 0 : index
    %1 = vector.load %arg2[%c0_1, %c0_2] : memref<16x3xf32, #tpu.memory_space<vmem>>, vector<16x3xf32>
    %c0_3 = arith.constant 0 : index
    %c0_4 = arith.constant 0 : index
    %2 = vector.load %arg3[%c0_3, %c0_4] : memref<256x128xbf16, #tpu.memory_space<vmem>>, vector<256x128xbf16>
    %3 = tpu.iota {dimensions = array<i32: 1>} : vector<16x256xi32>
    %4 = vector.extract_strided_slice %0 {offsets = [0, 0], sizes = [16, 1], strides = [1, 1]} : vector<16x3xi32> to vector<16x1xi32>
    %5 = vector.broadcast %4 : vector<16x1xi32> to vector<16x256xi32>
    %6 = arith.cmpi eq, %3, %5 : vector<16x256xi32>
    %7 = vector.extract_strided_slice %1 {offsets = [0, 0], sizes = [16, 1], strides = [1, 1]} : vector<16x3xf32> to vector<16x1xf32>
    %cst = arith.constant 0.000000e+00 : f32
    %8 = vector.shape_cast %7 : vector<16x1xf32> to vector<16x1xf32>
    %9 = vector.broadcast %8 : vector<16x1xf32> to vector<16x256xf32>
    %10 = vector.broadcast %cst : f32 to vector<16x256xf32>
    %11 = arith.select %6, %9, %10 : vector<16x256xi1>, vector<16x256xf32>
    %12 = vector.extract_strided_slice %0 {offsets = [0, 1], sizes = [16, 1], strides = [1, 1]} : vector<16x3xi32> to vector<16x1xi32>
    %13 = vector.broadcast %12 : vector<16x1xi32> to vector<16x256xi32>
    %14 = arith.cmpi eq, %3, %13 : vector<16x256xi32>
    %15 = vector.extract_strided_slice %1 {offsets = [0, 1], sizes = [16, 1], strides = [1, 1]} : vector<16x3xf32> to vector<16x1xf32>
    %cst_5 = arith.constant 0.000000e+00 : f32
    %16 = vector.shape_cast %15 : vector<16x1xf32> to vector<16x1xf32>
    %17 = vector.broadcast %16 : vector<16x1xf32> to vector<16x256xf32>
    %18 = vector.broadcast %cst_5 : f32 to vector<16x256xf32>
    %19 = arith.select %14, %17, %18 : vector<16x256xi1>, vector<16x256xf32>
    %20 = arith.addf %11, %19 : vector<16x256xf32>
    %21 = vector.extract_strided_slice %0 {offsets = [0, 2], sizes = [16, 1], strides = [1, 1]} : vector<16x3xi32> to vector<16x1xi32>
    %22 = vector.broadcast %21 : vector<16x1xi32> to vector<16x256xi32>
    %23 = arith.cmpi eq, %3, %22 : vector<16x256xi32>
    %24 = vector.extract_strided_slice %1 {offsets = [0, 2], sizes = [16, 1], strides = [1, 1]} : vector<16x3xf32> to vector<16x1xf32>
    %cst_6 = arith.constant 0.000000e+00 : f32
    %25 = vector.shape_cast %24 : vector<16x1xf32> to vector<16x1xf32>
    %26 = vector.broadcast %25 : vector<16x1xf32> to vector<16x256xf32>
    %27 = vector.broadcast %cst_6 : f32 to vector<16x256xf32>
    %28 = arith.select %23, %26, %27 : vector<16x256xi1>, vector<16x256xf32>
    %29 = arith.addf %20, %28 : vector<16x256xf32>
    %30 = arith.truncf %29 : vector<16x256xf32> to vector<16x256xbf16>
    %cst_7 = arith.constant dense<0.000000e+00> : vector<16x128xf32>
    %31 = tpu.matmul %30, %2, %cst_7 {dimension_numbers = #tpu.dot_dimension_numbers<[1], [0], [0], [1], [0, 0, 1, 1], [], []>} : vector<16x256xbf16>, vector<256x128xbf16>, vector<16x128xf32> -> vector<16x128xf32>
    %cst_8 = arith.constant dense<0.000000e+00> : vector<16xf32>
    %32 = vector.multi_reduction <add>, %31, %cst_8 [1] : vector<16x128xf32> to vector<16xf32>
    %33 = vector.shape_cast %32 : vector<16xf32> to vector<16x1xf32>
    %34 = arith.mulf %31, %31 : vector<16x128xf32>
    %cst_9 = arith.constant dense<0.000000e+00> : vector<16xf32>
    %35 = vector.multi_reduction <add>, %34, %cst_9 [1] : vector<16x128xf32> to vector<16xf32>
    %36 = vector.shape_cast %35 : vector<16xf32> to vector<16x1xf32>
    %cst_10 = arith.constant 7.812500e-03 : f32
    %37 = vector.broadcast %cst_10 : f32 to vector<16x1xf32>
    %38 = arith.mulf %33, %37 : vector<16x1xf32>
    %cst_11 = arith.constant 7.812500e-03 : f32
    %39 = vector.broadcast %cst_11 : f32 to vector<16x1xf32>
    %40 = arith.mulf %36, %39 : vector<16x1xf32>
    %41 = arith.mulf %38, %38 : vector<16x1xf32>
    %42 = arith.subf %40, %41 : vector<16x1xf32>
    %cst_12 = arith.constant 0.000000e+00 : f32
    %43 = vector.broadcast %cst_12 : f32 to vector<16x1xf32>
    %44 = arith.maximumf %42, %43 : vector<16x1xf32>
    %45 = vector.broadcast %38 : vector<16x1xf32> to vector<16x128xf32>
    %46 = arith.subf %31, %45 : vector<16x128xf32>
    %cst_13 = arith.constant 9.99999974E-6 : f32
    %47 = vector.broadcast %cst_13 : f32 to vector<16x1xf32>
    %48 = arith.addf %44, %47 : vector<16x1xf32>
    %49 = math.rsqrt %48 : vector<16x1xf32>
    %50 = vector.broadcast %49 : vector<16x1xf32> to vector<16x128xf32>
    %51 = arith.mulf %46, %50 : vector<16x128xf32>
    %c0_14 = arith.constant 0 : index
    %c0_15 = arith.constant 0 : index
    %52 = vector.load %arg4[%c0_14, %c0_15] : memref<1x128xf32, #tpu.memory_space<vmem>>, vector<1x128xf32>
    %53 = vector.broadcast %52 : vector<1x128xf32> to vector<16x128xf32>
    %54 = arith.mulf %51, %53 : vector<16x128xf32>
    %c0_16 = arith.constant 0 : index
    %c0_17 = arith.constant 0 : index
    %55 = vector.load %arg5[%c0_16, %c0_17] : memref<1x128xf32, #tpu.memory_space<vmem>>, vector<1x128xf32>
    %56 = vector.broadcast %55 : vector<1x128xf32> to vector<16x128xf32>
    %57 = arith.addf %54, %56 : vector<16x128xf32>
    %c0_18 = arith.constant 0 : index
    %c0_19 = arith.constant 0 : index
    %58 = vector.load %arg6[%c0_18, %c0_19] : memref<16x128xf32, #tpu.memory_space<vmem>>, vector<16x128xf32>
    tpu.vector_store %arg6[%c0_18, %c0_19], %57 {strides = array<i32>} : memref<16x128xf32, #tpu.memory_space<vmem>>, vector<16x128xf32>,
    return
  }
  func.func @transform_0(%arg0: i32) -> (i32, i32) {
    %c0_i32 = arith.constant 0 : i32
    %c0_i32_0 = arith.constant 0 : i32
    return %arg0, %c0_i32 : i32, i32
  }
  func.func @transform_1(%arg0: i32) -> (i32, i32) {
    %c0_i32 = arith.constant 0 : i32
    %c0_i32_0 = arith.constant 0 : i32
    return %arg0, %c0_i32 : i32, i32
  }
  func.func @transform_2(%arg0: i32) -> (i32, i32) {
    %c0_i32 = arith.constant 0 : i32
    %c0_i32_0 = arith.constant 0 : i32
    %c0_i32_1 = arith.constant 0 : i32
    return %c0_i32, %c0_i32_0 : i32, i32
  }
  func.func @transform_3(%arg0: i32) -> (i32, i32) {
    %c0_i32 = arith.constant 0 : i32
    %c0_i32_0 = arith.constant 0 : i32
    %c0_i32_1 = arith.constant 0 : i32
    return %c0_i32, %c0_i32_0 : i32, i32
  }
  func.func @transform_4(%arg0: i32) -> (i32, i32) {
    %c0_i32 = arith.constant 0 : i32
    %c0_i32_0 = arith.constant 0 : i32
    %c0_i32_1 = arith.constant 0 : i32
    return %c0_i32, %c0_i32_0 : i32, i32
  }
  func.func @transform_5(%arg0: i32) -> (i32, i32) {
    %c0_i32 = arith.constant 0 : i32
    %c0_i32_0 = arith.constant 0 : i32
    return %arg0, %c0_i32 : i32, i32
  }
}

module attributes {stable_mosaic.version = 11 : i64} {
  func.func @_hash_embedding_bag_kernel(%arg0: i32, %arg1: memref<16x3xi32, #tpu.memory_space<vmem>>, %arg2: memref<16x3xf32, #tpu.memory_space<vmem>>, %arg3: memref<256x128xbf16, #tpu.memory_space<vmem>>, %arg4: memref<1x128xf32, #tpu.memory_space<vmem>>, %arg5: memref<1x128xf32, #tpu.memory_space<vmem>>, %arg6: memref<16x128xf32, #tpu.memory_space<vmem>>) attributes {dimension_semantics = [#tpu.dimension_semantics<parallel>], iteration_bounds = array<i64: 1>, scalar_prefetch = 0 : i64, scratch_operands = 0 : i64, tpu.core_type = #tpu.core_type<tc>, window_params = [{transform_indices = @transform_0, window_bounds = array<i64: 16, 3>}, {transform_indices = @transform_1, window_bounds = array<i64: 16, 3>}, {pipeline_mode = #tpu.pipeline_mode<synchronous>, transform_indices = @transform_2, window_bounds = array<i64: 256, 128>}, {pipeline_mode = #tpu.pipeline_mode<synchronous>, transform_indices = @transform_3, window_bounds = array<i64: 1, 128>}, {pipeline_mode = #tpu.pipeline_mode<synchronous>, transform_indices = @transform_4, window_bounds = array<i64: 1, 128>}, {transform_indices = @transform_5, window_bounds = array<i64: 16, 128>}]} {
    %c0 = arith.constant 0 : index
    %c0_0 = arith.constant 0 : index
    %0 = vector.load %arg1[%c0, %c0_0] : memref<16x3xi32, #tpu.memory_space<vmem>>, vector<16x3xi32>
    %c0_1 = arith.constant 0 : index
    %c0_2 = arith.constant 0 : index
    %1 = vector.load %arg2[%c0_1, %c0_2] : memref<16x3xf32, #tpu.memory_space<vmem>>, vector<16x3xf32>
    %c0_3 = arith.constant 0 : index
    %c0_4 = arith.constant 0 : index
    %2 = vector.load %arg3[%c0_3, %c0_4] : memref<256x128xbf16, #tpu.memory_space<vmem>>, vector<256x128xbf16>
    %3 = tpu.iota {dimensions = array<i32: 1>} : vector<16x256xi32>
    %4 = vector.extract_strided_slice %0 {offsets = [0, 0], sizes = [16, 1], strides = [1, 1]} : vector<16x3xi32> to vector<16x1xi32>
    %5 = vector.broadcast %4 : vector<16x1xi32> to vector<16x256xi32>
    %6 = arith.cmpi eq, %3, %5 : vector<16x256xi32>
    %7 = vector.extract_strided_slice %1 {offsets = [0, 0], sizes = [16, 1], strides = [1, 1]} : vector<16x3xf32> to vector<16x1xf32>
    %cst = arith.constant 0.000000e+00 : f32
    %8 = vector.shape_cast %7 : vector<16x1xf32> to vector<16x1xf32>
    %9 = vector.broadcast %8 : vector<16x1xf32> to vector<16x256xf32>
    %10 = vector.broadcast %cst : f32 to vector<16x256xf32>
    %11 = arith.select %6, %9, %10 : vector<16x256xi1>, vector<16x256xf32>
    %12 = vector.extract_strided_slice %0 {offsets = [0, 1], sizes = [16, 1], strides = [1, 1]} : vector<16x3xi32> to vector<16x1xi32>
    %13 = vector.broadcast %12 : vector<16x1xi32> to vector<16x256xi32>
    %14 = arith.cmpi eq, %3, %13 : vector<16x256xi32>
    %15 = vector.extract_strided_slice %1 {offsets = [0, 1], sizes = [16, 1], strides = [1, 1]} : vector<16x3xf32> to vector<16x1xf32>
    %cst_5 = arith.constant 0.000000e+00 : f32
    %16 = vector.shape_cast %15 : vector<16x1xf32> to vector<16x1xf32>
    %17 = vector.broadcast %16 : vector<16x1xf32> to vector<16x256xf32>
    %18 = vector.broadcast %cst_5 : f32 to vector<16x256xf32>
    %19 = arith.select %14, %17, %18 : vector<16x256xi1>, vector<16x256xf32>
    %20 = arith.addf %11, %19 : vector<16x256xf32>
    %21 = vector.extract_strided_slice %0 {offsets = [0, 2], sizes = [16, 1], strides = [1, 1]} : vector<16x3xi32> to vector<16x1xi32>
    %22 = vector.broadcast %21 : vector<16x1xi32> to vector<16x256xi32>
    %23 = arith.cmpi eq, %3, %22 : vector<16x256xi32>
    %24 = vector.extract_strided_slice %1 {offsets = [0, 2], sizes = [16, 1], strides = [1, 1]} : vector<16x3xf32> to vector<16x1xf32>
    %cst_6 = arith.constant 0.000000e+00 : f32
    %25 = vector.shape_cast %24 : vector<16x1xf32> to vector<16x1xf32>
    %26 = vector.broadcast %25 : vector<16x1xf32> to vector<16x256xf32>
    %27 = vector.broadcast %cst_6 : f32 to vector<16x256xf32>
    %28 = arith.select %23, %26, %27 : vector<16x256xi1>, vector<16x256xf32>
    %29 = arith.addf %20, %28 : vector<16x256xf32>
    %30 = arith.truncf %29 : vector<16x256xf32> to vector<16x256xbf16>
    %cst_7 = arith.constant dense<0.000000e+00> : vector<16x128xf32>
    %31 = tpu.matmul %30, %2, %cst_7 {dimension_numbers = #tpu.dot_dimension_numbers<[1], [0], [0], [1], [0, 0, 1, 1], [], []>} : vector<16x256xbf16>, vector<256x128xbf16>, vector<16x128xf32> -> vector<16x128xf32>
    %cst_8 = arith.constant dense<0.000000e+00> : vector<16xf32>
    %32 = vector.multi_reduction <add>, %31, %cst_8 [1] : vector<16x128xf32> to vector<16xf32>
    %33 = vector.shape_cast %32 : vector<16xf32> to vector<16x1xf32>
    %34 = arith.mulf %31, %31 : vector<16x128xf32>
    %cst_9 = arith.constant dense<0.000000e+00> : vector<16xf32>
    %35 = vector.multi_reduction <add>, %34, %cst_9 [1] : vector<16x128xf32> to vector<16xf32>
    %36 = vector.shape_cast %35 : vector<16xf32> to vector<16x1xf32>
    %cst_10 = arith.constant 7.812500e-03 : f32
    %37 = vector.broadcast %cst_10 : f32 to vector<16x1xf32>
    %38 = arith.mulf %33, %37 : vector<16x1xf32>
    %cst_11 = arith.constant 7.812500e-03 : f32
    %39 = vector.broadcast %cst_11 : f32 to vector<16x1xf32>
    %40 = arith.mulf %36, %39 : vector<16x1xf32>
    %41 = arith.mulf %38, %38 : vector<16x1xf32>
    %42 = arith.subf %40, %41 : vector<16x1xf32>
    %cst_12 = arith.constant 0.000000e+00 : f32
    %43 = vector.broadcast %cst_12 : f32 to vector<16x1xf32>
    %44 = arith.maximumf %42, %43 : vector<16x1xf32>
    %45 = vector.broadcast %38 : vector<16x1xf32> to vector<16x128xf32>
    %46 = arith.subf %31, %45 : vector<16x128xf32>
    %cst_13 = arith.constant 9.99999974E-6 : f32
    %47 = vector.broadcast %cst_13 : f32 to vector<16x1xf32>
    %48 = arith.addf %44, %47 : vector<16x1xf32>
    %49 = math.rsqrt %48 : vector<16x1xf32>
    %50 = vector.broadcast %49 : vector<16x1xf32> to vector<16x128xf32>
    %51 = arith.mulf %46, %50 : vector<16x128xf32>
    %c0_14 = arith.constant 0 : index
    %c0_15 = arith.constant 0 : index
    %52 = vector.load %arg4[%c0_14, %c0_15] : memref<1x128xf32, #tpu.memory_space<vmem>>, vector<1x128xf32>
    %53 = vector.broadcast %52 : vector<1x128xf32> to vector<16x128xf32>
    %54 = arith.mulf %51, %53 : vector<16x128xf32>
    %c0_16 = arith.constant 0 : index
    %c0_17 = arith.constant 0 : index
    %55 = vector.load %arg5[%c0_16, %c0_17] : memref<1x128xf32, #tpu.memory_space<vmem>>, vector<1x128xf32>
    %56 = vector.broadcast %55 : vector<1x128xf32> to vector<16x128xf32>
    %57 = arith.addf %54, %56 : vector<16x128xf32>
    %c0_18 = arith.constant 0 : index
    %c0_19 = arith.constant 0 : index
    %58 = vector.load %arg6[%c0_18, %c0_19] : memref<16x128xf32, #tpu.memory_space<vmem>>, vector<16x128xf32>
    tpu.vector_store %arg6[%c0_18, %c0_19], %57 {strides = array<i32>} : memref<16x128xf32, #tpu.memory_space<vmem>>, vector<16x128xf32>,
    return
  }
  func.func @transform_0(%arg0: i32) -> (i32, i32) {
    %c0_i32 = arith.constant 0 : i32
    %c0_i32_0 = arith.constant 0 : i32
    return %arg0, %c0_i32 : i32, i32
  }
  func.func @transform_1(%arg0: i32) -> (i32, i32) {
    %c0_i32 = arith.constant 0 : i32
    %c0_i32_0 = arith.constant 0 : i32
    return %arg0, %c0_i32 : i32, i32
  }
  func.func @transform_2(%arg0: i32) -> (i32, i32) {
    %c0_i32 = arith.constant 0 : i32
    %c0_i32_0 = arith.constant 0 : i32
    %c0_i32_1 = arith.constant 0 : i32
    return %c0_i32, %c0_i32_0 : i32, i32
  }
  func.func @transform_3(%arg0: i32) -> (i32, i32) {
    %c0_i32 = arith.constant 0 : i32
    %c0_i32_0 = arith.constant 0 : i32
    %c0_i32_1 = arith.constant 0 : i32
    return %c0_i32, %c0_i32_0 : i32, i32
  }
  func.func @transform_4(%arg0: i32) -> (i32, i32) {
    %c0_i32 = arith.constant 0 : i32
    %c0_i32_0 = arith.constant 0 : i32
    %c0_i32_1 = arith.constant 0 : i32
    return %c0_i32, %c0_i32_0 : i32, i32
  }
  func.func @transform_5(%arg0: i32) -> (i32, i32) {
    %c0_i32 = arith.constant 0 : i32
    %c0_i32_0 = arith.constant 0 : i32
    return %arg0, %c0_i32 : i32, i32
  }
}

</mosaic_0001>

<llo_original>
// kernel: tpu_custom_call.1
$region0: #{tpu_custom_call.1}
  #allocation0 [shape = 'u32[]', space=smem, size = 0x4, offset = 0x4, fixed_abs, tag = 'smem constant byte address 0x4 - core index']
  #allocation1 [shape = 'u32[144,128]{1,0:T(1,128)}', space=vmem, size = 0x12000, scoped, tag = 'internal scratch']
  %s0 = inlined_call_operand.vmem [shape: s32[16,3], index: 0, kind: input, shape index: {}]
  %s1 = inlined_call_operand.vmem [shape: f32[16,3], index: 1, kind: input, shape index: {}]
  %s2 = inlined_call_operand.hbm [shape: bf16[256,128], index: 2, kind: input, shape index: {}]
  %s3 = inlined_call_operand.vmem [shape: f32[1,128], index: 3, kind: input, shape index: {}]
  %s4 = inlined_call_operand.vmem [shape: f32[1,128], index: 4, kind: input, shape index: {}]
  %s5 = inlined_call_operand.hbm [shape: f32[16,128], index: 5, kind: output, shape index: {}]
  %s6 = sld [smem:[#allocation0]]
  $region34: #{tpu_custom_call.1} parent=0
    _
  %s8 = ssub.s32 1, %s6
  %s9 = scalar_select 0, %s8, %s6
  $region1: #{tpu_custom_call.1} parent=0
    #allocation2 [shape = 'u8[65536]{0}', space=vmem, size = 0x10000, scoped, tag = 'input window, operand 2, single buffered']
    #allocation3 [shape = 's32[1]{0}', space=sflag, size = 0x4, scoped, tag = 'scoped memory for tpu_custom_call.1']
    #allocation4 [shape = 's32[1]{0}', space=sflag, size = 0x4, scoped, tag = 'scoped memory for tpu_custom_call.1']
    #allocation5 [shape = 'u8[8192]{0}', space=vmem, size = 0x2000, scoped, tag = 'output window, operand 0, single buffered']
    %10 = vsyncpa [#allocation3], 0
    %11 = vsyncpa [#allocation4], 0
    // Predicated region
    $region2: #{tpu_custom_call.1} parent=1 // pred_check
      _
    $region3: #{tpu_custom_call.1} parent=1 // pred_check_branch
      %13 = sbr.rel (0) target = $region5
    $region4: #{tpu_custom_call.1} parent=1 // pred_region
      _
    $region5: #{tpu_custom_call.1} parent=1 // pred_fallthru
      _
    // Predicated region
    $region6: #{tpu_custom_call.1} parent=1 // pred_check
      _
    $region7: #{tpu_custom_call.1} parent=1 // pred_check_branch
      %15 = sbr.rel (0) target = $region9
    $region8: #{tpu_custom_call.1} parent=1 // pred_region
      _
    $region9: #{tpu_custom_call.1} parent=1 // pred_fallthru
      _
    // Predicated region
    $region10: #{tpu_custom_call.1} parent=1 // pred_check
      _
    $region11: #{tpu_custom_call.1} parent=1 // pred_check_branch
      %17 = sbr.rel (0) target = $region13
    $region12: #{tpu_custom_call.1} parent=1 // pred_region
      %s19 = ssub.s32 2048, 2048
      %20 = vsyncadd [#allocation3], %s19
      %s21 = sshll.u32 [#allocation2], 4
      %s22 = int_to_ptr.vmem [resolvable:$true] %s21
      %27 = dma.hbm_to_vmem [thread:$0]  %s2, 2048, %s22, [#allocation3], 64, 64, 4
    $region13: #{tpu_custom_call.1} parent=1 // pred_fallthru
      _
    // Predicated region
    $region14: #{tpu_custom_call.1} parent=1 // pred_check
      _
    $region15: #{tpu_custom_call.1} parent=1 // pred_check_branch
      %29 = sbr.rel (0) target = $region17
    $region16: #{tpu_custom_call.1} parent=1 // pred_region
      _
    $region17: #{tpu_custom_call.1} parent=1 // pred_fallthru
      _
    // Predicated region
    $region18: #{tpu_custom_call.1} parent=1 // pred_check
      _
    $region19: #{tpu_custom_call.1} parent=1 // pred_check_branch
      %31 = sbr.rel (0) target = $region21
    $region20: #{tpu_custom_call.1} parent=1 // pred_region
      _
    $region21: #{tpu_custom_call.1} parent=1 // pred_fallthru
      _
    // Predicated region
    $region22: #{tpu_custom_call.1} parent=1 // pred_check
      _
    $region23: #{tpu_custom_call.1} parent=1 // pred_check_branch
      %33 = sbr.rel (0) target = $region25
    $region24: #{tpu_custom_call.1} parent=1 // pred_region
      %34 = dma.done [#allocation3], 2048
    $region25: #{tpu_custom_call.1} parent=1 // pred_fallthru
      _
    %v36 = vld [vmem:[%s0] sm:$0xff]
    %v37 = vld [vmem:[%s0 + $0x8] sm:$0xff]
    %v38 = vld [vmem:[%s1] sm:$0xff]
    %v39 = vld [vmem:[%s1 + $0x8] sm:$0xff]
    %v40 = vld [vmem:[#allocation2] sm:$0xf]
    %v41 = vld [vmem:[#allocation2 + $0x4] sm:$0xf]
    %v42 = vld [vmem:[#allocation2 + $0x8] sm:$0xf]
    %v43 = vld [vmem:[#allocation2 + $0xc] sm:$0xf]
    %v44 = vld [vmem:[#allocation2 + $0x10] sm:$0xf]
    %v45 = vld [vmem:[#allocation2 + $0x14] sm:$0xf]
    %v46 = vld [vmem:[#allocation2 + $0x18] sm:$0xf]
    %v47 = vld [vmem:[#allocation2 + $0x1c] sm:$0xf]
    %v48 = vld [vmem:[#allocation2 + $0x20] sm:$0xf]
    %v49 = vld [vmem:[#allocation2 + $0x24] sm:$0xf]
    %v50 = vld [vmem:[#allocation2 + $0x28] sm:$0xf]
    %v51 = vld [vmem:[#allocation2 + $0x2c] sm:$0xf]
    %v52 = vld [vmem:[#allocation2 + $0x30] sm:$0xf]
    %v53 = vld [vmem:[#allocation2 + $0x34] sm:$0xf]
    %v54 = vld [vmem:[#allocation2 + $0x38] sm:$0xf]
    %v55 = vld [vmem:[#allocation2 + $0x3c] sm:$0xf]
    %v56 = vld [vmem:[#allocation2 + $0x40] sm:$0xf]
    %v57 = vld [vmem:[#allocation2 + $0x44] sm:$0xf]
    %v58 = vld [vmem:[#allocation2 + $0x48] sm:$0xf]
    %v59 = vld [vmem:[#allocation2 + $0x4c] sm:$0xf]
    %v60 = vld [vmem:[#allocation2 + $0x50] sm:$0xf]
    %v61 = vld [vmem:[#allocation2 + $0x54] sm:$0xf]
    %v62 = vld [vmem:[#allocation2 + $0x58] sm:$0xf]
    %v63 = vld [vmem:[#allocation2 + $0x5c] sm:$0xf]
    %v64 = vld [vmem:[#allocation2 + $0x60] sm:$0xf]
    %v65 = vld [vmem:[#allocation2 + $0x64] sm:$0xf]
    %v66 = vld [vmem:[#allocation2 + $0x68] sm:$0xf]
    %v67 = vld [vmem:[#allocation2 + $0x6c] sm:$0xf]
    %v68 = vld [vmem:[#allocation2 + $0x70] sm:$0xf]
    %v69 = vld [vmem:[#allocation2 + $0x74] sm:$0xf]
    %v70 = vld [vmem:[#allocation2 + $0x78] sm:$0xf]
    %v71 = vld [vmem:[#allocation2 + $0x7c] sm:$0xf]
    %v72 = vlaneseq
    %v73 = vand.u32 %v72, 127
    %v74 = vadd.s32 %v73, 128
    %75 = vset.pattern.permute.xlu0 0
    %76 = vperm.xlu0 %75, %v36
    %v77 = vpop.permute.xlu0 %76
    %78 = vset.pattern.permute.xlu0 0
    %79 = vperm.xlu0 %78, %v37
    %v80 = vpop.permute.xlu0 %79
    %vm81 = vcmp.eq.s32.totalorder %v73, %v77
    %vm82 = vcmp.eq.s32.totalorder %v74, %v77
    %vm83 = vcmp.eq.s32.totalorder %v73, %v80
    %vm84 = vcmp.eq.s32.totalorder %v74, %v80
    %86 = vset.pattern.permute.xlu0 0
    %87 = vperm.xlu0 %86, %v38
    %v88 = vpop.permute.xlu0 %87
    %91 = vset.pattern.permute.xlu0 0
    %92 = vperm.xlu0 %91, %v39
    %v93 = vpop.permute.xlu0 %92
    %v95 = vsel %vm81, %v88, 0.0
    %v96 = vsel %vm82, %v88, 0.0
    %v97 = vsel %vm83, %v93, 0.0
    %v98 = vsel %vm84, %v93, 0.0
    %99 = vset.pattern.permute.xlu0 1
    %100 = vperm.xlu0 %99, %v36
    %v101 = vpop.permute.xlu0 %100
    %102 = vset.pattern.permute.xlu0 1
    %103 = vperm.xlu0 %102, %v37
    %v104 = vpop.permute.xlu0 %103
    %vm105 = vcmp.eq.s32.totalorder %v73, %v101
    %vm106 = vcmp.eq.s32.totalorder %v74, %v101
    %vm107 = vcmp.eq.s32.totalorder %v73, %v104
    %vm108 = vcmp.eq.s32.totalorder %v74, %v104
    %109 = vset.pattern.permute.xlu0 1
    %110 = vperm.xlu0 %109, %v38
    %v111 = vpop.permute.xlu0 %110
    %113 = vset.pattern.permute.xlu0 1
    %114 = vperm.xlu0 %113, %v39
    %v115 = vpop.permute.xlu0 %114
    %v117 = vsel %vm105, %v111, 0.0
    %v118 = vsel %vm106, %v111, 0.0
    %v119 = vsel %vm107, %v115, 0.0
    %v120 = vsel %vm108, %v115, 0.0
    %v121 = vadd.f32 %v95, %v117
    %v122 = vadd.f32 %v96, %v118
    %v123 = vadd.f32 %v97, %v119
    %v124 = vadd.f32 %v98, %v120
    %125 = vset.pattern.permute.xlu0 2
    %126 = vperm.xlu0 %125, %v36
    %v127 = vpop.permute.xlu0 %126
    %128 = vset.pattern.permute.xlu0 2
    %129 = vperm.xlu0 %128, %v37
    %v130 = vpop.permute.xlu0 %129
    %vm131 = vcmp.eq.s32.totalorder %v73, %v127
    %vm132 = vcmp.eq.s32.totalorder %v74, %v127
    %vm133 = vcmp.eq.s32.totalorder %v73, %v130
    %vm134 = vcmp.eq.s32.totalorder %v74, %v130
    %135 = vset.pattern.permute.xlu0 2
    %136 = vperm.xlu0 %135, %v38
    %v137 = vpop.permute.xlu0 %136
    %139 = vset.pattern.permute.xlu0 2
    %140 = vperm.xlu0 %139, %v39
    %v141 = vpop.permute.xlu0 %140
    %v143 = vsel %vm131, %v137, 0.0
    %v144 = vsel %vm132, %v137, 0.0
    %v145 = vsel %vm133, %v141, 0.0
    %v146 = vsel %vm134, %v141, 0.0
    %v147 = vadd.f32 %v121, %v143
    %v148 = vadd.f32 %v122, %v144
    %v149 = vadd.f32 %v123, %v145
    %v150 = vadd.f32 %v124, %v146
    %v151 = vpack.c.bf16 %v149, %v147
    %v152 = vpack.c.bf16 %v150, %v148
    %v185 = vunpack.c.l.b16 %v40
    %v186 = vunpack.c.l.b16 %v41
    %v187 = vunpack.c.l.b16 %v42
    %v188 = vunpack.c.l.b16 %v43
    %v189 = vunpack.c.l.b16 %v44
    %v190 = vunpack.c.l.b16 %v45
    %v191 = vunpack.c.l.b16 %v46
    %v192 = vunpack.c.l.b16 %v47
    %v193 = vunpack.c.l.b16 %v48
    %v194 = vunpack.c.l.b16 %v49
    %v195 = vunpack.c.l.b16 %v50
    %v196 = vunpack.c.l.b16 %v51
    %v197 = vunpack.c.l.b16 %v52
    %v198 = vunpack.c.l.b16 %v53
    %v199 = vunpack.c.l.b16 %v54
    %v200 = vunpack.c.l.b16 %v55
    %v201 = vunpack.c.l.b16 %v56
    %v202 = vunpack.c.l.b16 %v57
    %v203 = vunpack.c.l.b16 %v58
    %v204 = vunpack.c.l.b16 %v59
    %v205 = vunpack.c.l.b16 %v60
    %v206 = vunpack.c.l.b16 %v61
    %v207 = vunpack.c.l.b16 %v62
    %v208 = vunpack.c.l.b16 %v63
    %v209 = vunpack.c.l.b16 %v64
    %v210 = vunpack.c.l.b16 %v65
    %v211 = vunpack.c.l.b16 %v66
    %v212 = vunpack.c.l.b16 %v67
    %v213 = vunpack.c.l.b16 %v68
    %v214 = vunpack.c.l.b16 %v69
    %v215 = vunpack.c.l.b16 %v70
    %v216 = vunpack.c.l.b16 %v71
    %v217 = vpack.c.b16 %v186, %v185
    %v218 = vpack.c.b16 %v188, %v187
    %v219 = vpack.c.b16 %v190, %v189
    %v220 = vpack.c.b16 %v192, %v191
    %v221 = vpack.c.b16 %v194, %v193
    %v222 = vpack.c.b16 %v196, %v195
    %v223 = vpack.c.b16 %v198, %v197
    %v224 = vpack.c.b16 %v200, %v199
    %v225 = vpack.c.b16 %v202, %v201
    %v226 = vpack.c.b16 %v204, %v203
    %v227 = vpack.c.b16 %v206, %v205
    %v228 = vpack.c.b16 %v208, %v207
    %v229 = vpack.c.b16 %v210, %v209
    %v230 = vpack.c.b16 %v212, %v211
    %v231 = vpack.c.b16 %v214, %v213
    %v232 = vpack.c.b16 %v216, %v215
    %249 = vmatprep.subr.bf16.mxu0 0
    %250 = vmatpush1.bf16.msra.mxu0 %v224
    %251 = vmatprep.subr.bf16.mxu0 0
    %252 = vmatpush1.bf16.msra.mxu0 %v223
    %253 = vmatprep.subr.bf16.mxu0 0
    %254 = vmatpush1.bf16.msra.mxu0 %v222
    %255 = vmatprep.subr.bf16.mxu0 0
    %256 = vmatpush1.bf16.msra.mxu0 %v221
    %257 = vmatprep.subr.bf16.mxu0 0
    %258 = vmatpush1.bf16.msra.mxu0 %v220
    %259 = vmatprep.subr.bf16.mxu0 0
    %260 = vmatpush1.bf16.msra.mxu0 %v219
    %261 = vmatprep.subr.bf16.mxu0 0
    %262 = vmatpush1.bf16.msra.mxu0 %v218
    %263 = vmatprep.subr.bf16.mxu0 0
    %264 = vmatpush1.bf16.msra.mxu0 %v217
    %265 = vmatprep.subr.bf16.mxu0 0
    %266 = vmatpush2.bf16.msra.mxu0 %v232
    %267 = vmatprep.subr.bf16.mxu0 0
    %268 = vmatpush2.bf16.msra.mxu0 %v231
    %269 = vmatprep.subr.bf16.mxu0 0
    %270 = vmatpush2.bf16.msra.mxu0 %v230
    %271 = vmatprep.subr.bf16.mxu0 0
    %272 = vmatpush2.bf16.msra.mxu0 %v229
    %273 = vmatprep.subr.bf16.mxu0 0
    %274 = vmatpush2.bf16.msra.mxu0 %v228
    %275 = vmatprep.subr.bf16.mxu0 0
    %276 = vmatpush2.bf16.msra.mxu0 %v227
    %277 = vmatprep.subr.bf16.mxu0 0
    %278 = vmatpush2.bf16.msra.mxu0 %v226
    %279 = vmatprep.subr.bf16.mxu0 0
    %280 = vmatpush2.bf16.msra.mxu0 %v225
    %281 = vmatprep.mubr.bf16.mxu0 %v152
    %282 = vmatmul.mubr.bf16.gmra.mxu0 %v151
    %v283 = vpop.f32.mrf.mxu0
    %v284 = vadd.f32 0.0, %v283
    %v285 = vpop.f32.mrf.mxu0
    %v286 = vpop.f32.mrf.mxu0
    %v287 = vadd.f32 0.0, %v286
    %v288 = vpop.f32.mrf.mxu0
    %289 = vdwg.mxu0
    %290 = vadd.xlane.f32.xlu0 %v284
    %v291 = vpop.xlane.xlu0 %290
    %292 = vadd.xlane.f32.xlu0 %v287
    %v293 = vpop.xlane.xlu0 %292
    %v294 = vmul.f32 %v284, %v284
    %v295 = vmul.f32 %v287, %v287
    %296 = vadd.xlane.f32.xlu0 %v294
    %v297 = vpop.xlane.xlu0 %296
    %298 = vadd.xlane.f32.xlu0 %v295
    %v299 = vpop.xlane.xlu0 %298
    %v300 = vmul.f32 %v291, 0.0078125
    %v301 = vmul.f32 %v293, 0.0078125
    %v302 = vmul.f32 %v297, 0.0078125
    %v303 = vmul.f32 %v299, 0.0078125
    %v304 = vmul.f32 %v300, %v300
    %v305 = vmul.f32 %v301, %v301
    %v306 = vsub.f32 %v302, %v304
    %v307 = vsub.f32 %v303, %v305
    %v308 = vmax.f32 %v306, 0.0
    %v309 = vmax.f32 %v307, 0.0
    %v310 = vsub.f32 %v284, %v300
    %v311 = vsub.f32 %v287, %v301
    %v312 = vadd.f32 %v308, 1e-05
    %v313 = vadd.f32 %v309, 1e-05
    %v314 = vrsqrt.pop %v312
    %v315 = vrsqrt.pop %v313
    %v316 = vmul.f32 %v310, %v314
    %v317 = vmul.f32 %v311, %v315
    %v318 = vld [vmem:[%s3] sm:$0x1]
    %v320 = vlaneseq
    %v321 = vshrl.u32 %v320, 7
    %v322 = vsub.s32 0, %v321
    %v323 = vrot.slane %v318, %v322
    %v325 = vmul.f32 %v316, %v323
    %v326 = vmul.f32 %v317, %v323
    %v327 = vld [vmem:[%s4] sm:$0x1]
    %v329 = vlaneseq
    %v330 = vshrl.u32 %v329, 7
    %v331 = vsub.s32 0, %v330
    %v332 = vrot.slane %v327, %v331
    %v334 = vadd.f32 %v325, %v332
    %v335 = vadd.f32 %v326, %v332
    %336 = vst [vmem:[#allocation5] sm:$0xff] %v334
    %337 = vst [vmem:[#allocation5 + $0x8] sm:$0xff] %v335
    // Predicated region
    $region26: #{tpu_custom_call.1} parent=1 // pred_check
      _
    $region27: #{tpu_custom_call.1} parent=1 // pred_check_branch
      %339 = sbr.rel (0) target = $region29
    $region28: #{tpu_custom_call.1} parent=1 // pred_region
      %s341 = ssub.s32 256, 256
      %342 = vsyncadd [#allocation4], %s341
      %s343 = sshll.u32 [#allocation5], 4
      %s344 = int_to_ptr.vmem [resolvable:$true] %s343
      %349 = dma.vmem_to_hbm [thread:$0]  %s344, 256, %s5, [#allocation4], 128, 128, 8
    $region29: #{tpu_custom_call.1} parent=1 // pred_fallthru
      _
    // Predicated region
    $region30: #{tpu_custom_call.1} parent=1 // pred_check
      _
    $region31: #{tpu_custom_call.1} parent=1 // pred_check_branch
      %351 = sbr.rel (0) target = $region33
    $region32: #{tpu_custom_call.1} parent=1 // pred_region
      %352 = dma.done [#allocation4], 256
    $region33: #{tpu_custom_call.1} parent=1 // pred_fallthru
      _
    %353 = vsyncpa [#allocation3], 1
    %354 = vsyncpa [#allocation4], 1

// kernel: tpu_custom_call.1
$region0: #{tpu_custom_call.1}
  #allocation0 [shape = 'u32[]', space=smem, size = 0x4, offset = 0x4, fixed_abs, tag = 'smem constant byte address 0x4 - core index']
  #allocation1 [shape = 'u32[144,128]{1,0:T(1,128)}', space=vmem, size = 0x12000, scoped, tag = 'internal scratch']
  %s0 = inlined_call_operand.vmem [shape: s32[16,3], index: 0, kind: input, shape index: {}]
  %s1 = inlined_call_operand.vmem [shape: f32[16,3], index: 1, kind: input, shape index: {}]
  %s2 = inlined_call_operand.hbm [shape: bf16[256,128], index: 2, kind: input, shape index: {}]
  %s3 = inlined_call_operand.vmem [shape: f32[1,128], index: 3, kind: input, shape index: {}]
  %s4 = inlined_call_operand.vmem [shape: f32[1,128], index: 4, kind: input, shape index: {}]
  %s5 = inlined_call_operand.hbm [shape: f32[16,128], index: 5, kind: output, shape index: {}]
  %s6 = sld [smem:[#allocation0]]
  $region34: #{tpu_custom_call.1} parent=0
    _
  %s8 = ssub.s32 1, %s6
  %s9 = scalar_select 0, %s8, %s6
  $region1: #{tpu_custom_call.1} parent=0
    #allocation2 [shape = 'u8[65536]{0}', space=vmem, size = 0x10000, scoped, tag = 'input window, operand 2, single buffered']
    #allocation3 [shape = 's32[1]{0}', space=sflag, size = 0x4, scoped, tag = 'scoped memory for tpu_custom_call.1']
    #allocation4 [shape = 's32[1]{0}', space=sflag, size = 0x4, scoped, tag = 'scoped memory for tpu_custom_call.1']
    #allocation5 [shape = 'u8[8192]{0}', space=vmem, size = 0x2000, scoped, tag = 'output window, operand 0, single buffered']
    %10 = vsyncpa [#allocation3], 0
    %11 = vsyncpa [#allocation4], 0
    // Predicated region
    $region2: #{tpu_custom_call.1} parent=1 // pred_check
      _
    $region3: #{tpu_custom_call.1} parent=1 // pred_check_branch
      %13 = sbr.rel (0) target = $region5
    $region4: #{tpu_custom_call.1} parent=1 // pred_region
      _
    $region5: #{tpu_custom_call.1} parent=1 // pred_fallthru
      _
    // Predicated region
    $region6: #{tpu_custom_call.1} parent=1 // pred_check
      _
    $region7: #{tpu_custom_call.1} parent=1 // pred_check_branch
      %15 = sbr.rel (0) target = $region9
    $region8: #{tpu_custom_call.1} parent=1 // pred_region
      _
    $region9: #{tpu_custom_call.1} parent=1 // pred_fallthru
      _
    // Predicated region
    $region10: #{tpu_custom_call.1} parent=1 // pred_check
      _
    $region11: #{tpu_custom_call.1} parent=1 // pred_check_branch
      %17 = sbr.rel (0) target = $region13
    $region12: #{tpu_custom_call.1} parent=1 // pred_region
      %s19 = ssub.s32 2048, 2048
      %20 = vsyncadd [#allocation3], %s19
      %s21 = sshll.u32 [#allocation2], 4
      %s22 = int_to_ptr.vmem [resolvable:$true] %s21
      %27 = dma.hbm_to_vmem [thread:$0]  %s2, 2048, %s22, [#allocation3], 64, 64, 4
    $region13: #{tpu_custom_call.1} parent=1 // pred_fallthru
      _
    // Predicated region
    $region14: #{tpu_custom_call.1} parent=1 // pred_check
      _
    $region15: #{tpu_custom_call.1} parent=1 // pred_check_branch
      %29 = sbr.rel (0) target = $region17
    $region16: #{tpu_custom_call.1} parent=1 // pred_region
      _
    $region17: #{tpu_custom_call.1} parent=1 // pred_fallthru
      _
    // Predicated region
    $region18: #{tpu_custom_call.1} parent=1 // pred_check
      _
    $region19: #{tpu_custom_call.1} parent=1 // pred_check_branch
      %31 = sbr.rel (0) target = $region21
    $region20: #{tpu_custom_call.1} parent=1 // pred_region
      _
    $region21: #{tpu_custom_call.1} parent=1 // pred_fallthru
      _
    // Predicated region
    $region22: #{tpu_custom_call.1} parent=1 // pred_check
      _
    $region23: #{tpu_custom_call.1} parent=1 // pred_check_branch
      %33 = sbr.rel (0) target = $region25
    $region24: #{tpu_custom_call.1} parent=1 // pred_region
      %34 = dma.done [#allocation3], 2048
    $region25: #{tpu_custom_call.1} parent=1 // pred_fallthru
      _
    %v36 = vld [vmem:[%s0] sm:$0xff]
    %v37 = vld [vmem:[%s0 + $0x8] sm:$0xff]
    %v38 = vld [vmem:[%s1] sm:$0xff]
    %v39 = vld [vmem:[%s1 + $0x8] sm:$0xff]
    %v40 = vld [vmem:[#allocation2] sm:$0xf]
    %v41 = vld [vmem:[#allocation2 + $0x4] sm:$0xf]
    %v42 = vld [vmem:[#allocation2 + $0x8] sm:$0xf]
    %v43 = vld [vmem:[#allocation2 + $0xc] sm:$0xf]
    %v44 = vld [vmem:[#allocation2 + $0x10] sm:$0xf]
    %v45 = vld [vmem:[#allocation2 + $0x14] sm:$0xf]
    %v46 = vld [vmem:[#allocation2 + $0x18] sm:$0xf]
    %v47 = vld [vmem:[#allocation2 + $0x1c] sm:$0xf]
    %v48 = vld [vmem:[#allocation2 + $0x20] sm:$0xf]
    %v49 = vld [vmem:[#allocation2 + $0x24] sm:$0xf]
    %v50 = vld [vmem:[#allocation2 + $0x28] sm:$0xf]
    %v51 = vld [vmem:[#allocation2 + $0x2c] sm:$0xf]
    %v52 = vld [vmem:[#allocation2 + $0x30] sm:$0xf]
    %v53 = vld [vmem:[#allocation2 + $0x34] sm:$0xf]
    %v54 = vld [vmem:[#allocation2 + $0x38] sm:$0xf]
    %v55 = vld [vmem:[#allocation2 + $0x3c] sm:$0xf]
    %v56 = vld [vmem:[#allocation2 + $0x40] sm:$0xf]
    %v57 = vld [vmem:[#allocation2 + $0x44] sm:$0xf]
    %v58 = vld [vmem:[#allocation2 + $0x48] sm:$0xf]
    %v59 = vld [vmem:[#allocation2 + $0x4c] sm:$0xf]
    %v60 = vld [vmem:[#allocation2 + $0x50] sm:$0xf]
    %v61 = vld [vmem:[#allocation2 + $0x54] sm:$0xf]
    %v62 = vld [vmem:[#allocation2 + $0x58] sm:$0xf]
    %v63 = vld [vmem:[#allocation2 + $0x5c] sm:$0xf]
    %v64 = vld [vmem:[#allocation2 + $0x60] sm:$0xf]
    %v65 = vld [vmem:[#allocation2 + $0x64] sm:$0xf]
    %v66 = vld [vmem:[#allocation2 + $0x68] sm:$0xf]
    %v67 = vld [vmem:[#allocation2 + $0x6c] sm:$0xf]
    %v68 = vld [vmem:[#allocation2 + $0x70] sm:$0xf]
    %v69 = vld [vmem:[#allocation2 + $0x74] sm:$0xf]
    %v70 = vld [vmem:[#allocation2 + $0x78] sm:$0xf]
    %v71 = vld [vmem:[#allocation2 + $0x7c] sm:$0xf]
    %v72 = vlaneseq
    %v73 = vand.u32 %v72, 127
    %v74 = vadd.s32 %v73, 128
    %75 = vset.pattern.permute.xlu0 0
    %76 = vperm.xlu0 %75, %v36
    %v77 = vpop.permute.xlu0 %76
    %78 = vset.pattern.permute.xlu0 0
    %79 = vperm.xlu0 %78, %v37
    %v80 = vpop.permute.xlu0 %79
    %vm81 = vcmp.eq.s32.totalorder %v73, %v77
    %vm82 = vcmp.eq.s32.totalorder %v74, %v77
    %vm83 = vcmp.eq.s32.totalorder %v73, %v80
    %vm84 = vcmp.eq.s32.totalorder %v74, %v80
    %86 = vset.pattern.permute.xlu0 0
    %87 = vperm.xlu0 %86, %v38
    %v88 = vpop.permute.xlu0 %87
    %91 = vset.pattern.permute.xlu0 0
    %92 = vperm.xlu0 %91, %v39
    %v93 = vpop.permute.xlu0 %92
    %v95 = vsel %vm81, %v88, 0.0
    %v96 = vsel %vm82, %v88, 0.0
    %v97 = vsel %vm83, %v93, 0.0
    %v98 = vsel %vm84, %v93, 0.0
    %99 = vset.pattern.permute.xlu0 1
    %100 = vperm.xlu0 %99, %v36
    %v101 = vpop.permute.xlu0 %100
    %102 = vset.pattern.permute.xlu0 1
    %103 = vperm.xlu0 %102, %v37
    %v104 = vpop.permute.xlu0 %103
    %vm105 = vcmp.eq.s32.totalorder %v73, %v101
    %vm106 = vcmp.eq.s32.totalorder %v74, %v101
    %vm107 = vcmp.eq.s32.totalorder %v73, %v104
    %vm108 = vcmp.eq.s32.totalorder %v74, %v104
    %109 = vset.pattern.permute.xlu0 1
    %110 = vperm.xlu0 %109, %v38
    %v111 = vpop.permute.xlu0 %110
    %113 = vset.pattern.permute.xlu0 1
    %114 = vperm.xlu0 %113, %v39
    %v115 = vpop.permute.xlu0 %114
    %v117 = vsel %vm105, %v111, 0.0
    %v118 = vsel %vm106, %v111, 0.0
    %v119 = vsel %vm107, %v115, 0.0
    %v120 = vsel %vm108, %v115, 0.0
    %v121 = vadd.f32 %v95, %v117
    %v122 = vadd.f32 %v96, %v118
    %v123 = vadd.f32 %v97, %v119
    %v124 = vadd.f32 %v98, %v120
    %125 = vset.pattern.permute.xlu0 2
    %126 = vperm.xlu0 %125, %v36
    %v127 = vpop.permute.xlu0 %126
    %128 = vset.pattern.permute.xlu0 2
    %129 = vperm.xlu0 %128, %v37
    %v130 = vpop.permute.xlu0 %129
    %vm131 = vcmp.eq.s32.totalorder %v73, %v127
    %vm132 = vcmp.eq.s32.totalorder %v74, %v127
    %vm133 = vcmp.eq.s32.totalorder %v73, %v130
    %vm134 = vcmp.eq.s32.totalorder %v74, %v130
    %135 = vset.pattern.permute.xlu0 2
    %136 = vperm.xlu0 %135, %v38
    %v137 = vpop.permute.xlu0 %136
    %139 = vset.pattern.permute.xlu0 2
    %140 = vperm.xlu0 %139, %v39
    %v141 = vpop.permute.xlu0 %140
    %v143 = vsel %vm131, %v137, 0.0
    %v144 = vsel %vm132, %v137, 0.0
    %v145 = vsel %vm133, %v141, 0.0
    %v146 = vsel %vm134, %v141, 0.0
    %v147 = vadd.f32 %v121, %v143
    %v148 = vadd.f32 %v122, %v144
    %v149 = vadd.f32 %v123, %v145
    %v150 = vadd.f32 %v124, %v146
    %v151 = vpack.c.bf16 %v149, %v147
    %v152 = vpack.c.bf16 %v150, %v148
    %v185 = vunpack.c.l.b16 %v40
    %v186 = vunpack.c.l.b16 %v41
    %v187 = vunpack.c.l.b16 %v42
    %v188 = vunpack.c.l.b16 %v43
    %v189 = vunpack.c.l.b16 %v44
    %v190 = vunpack.c.l.b16 %v45
    %v191 = vunpack.c.l.b16 %v46
    %v192 = vunpack.c.l.b16 %v47
    %v193 = vunpack.c.l.b16 %v48
    %v194 = vunpack.c.l.b16 %v49
    %v195 = vunpack.c.l.b16 %v50
    %v196 = vunpack.c.l.b16 %v51
    %v197 = vunpack.c.l.b16 %v52
    %v198 = vunpack.c.l.b16 %v53
    %v199 = vunpack.c.l.b16 %v54
    %v200 = vunpack.c.l.b16 %v55
    %v201 = vunpack.c.l.b16 %v56
    %v202 = vunpack.c.l.b16 %v57
    %v203 = vunpack.c.l.b16 %v58
    %v204 = vunpack.c.l.b16 %v59
    %v205 = vunpack.c.l.b16 %v60
    %v206 = vunpack.c.l.b16 %v61
    %v207 = vunpack.c.l.b16 %v62
    %v208 = vunpack.c.l.b16 %v63
    %v209 = vunpack.c.l.b16 %v64
    %v210 = vunpack.c.l.b16 %v65
    %v211 = vunpack.c.l.b16 %v66
    %v212 = vunpack.c.l.b16 %v67
    %v213 = vunpack.c.l.b16 %v68
    %v214 = vunpack.c.l.b16 %v69
    %v215 = vunpack.c.l.b16 %v70
    %v216 = vunpack.c.l.b16 %v71
    %v217 = vpack.c.b16 %v186, %v185
    %v218 = vpack.c.b16 %v188, %v187
    %v219 = vpack.c.b16 %v190, %v189
    %v220 = vpack.c.b16 %v192, %v191
    %v221 = vpack.c.b16 %v194, %v193
    %v222 = vpack.c.b16 %v196, %v195
    %v223 = vpack.c.b16 %v198, %v197
    %v224 = vpack.c.b16 %v200, %v199
    %v225 = vpack.c.b16 %v202, %v201
    %v226 = vpack.c.b16 %v204, %v203
    %v227 = vpack.c.b16 %v206, %v205
    %v228 = vpack.c.b16 %v208, %v207
    %v229 = vpack.c.b16 %v210, %v209
    %v230 = vpack.c.b16 %v212, %v211
    %v231 = vpack.c.b16 %v214, %v213
    %v232 = vpack.c.b16 %v216, %v215
    %249 = vmatprep.subr.bf16.mxu0 0
    %250 = vmatpush1.bf16.msra.mxu0 %v224
    %251 = vmatprep.subr.bf16.mxu0 0
    %252 = vmatpush1.bf16.msra.mxu0 %v223
    %253 = vmatprep.subr.bf16.mxu0 0
    %254 = vmatpush1.bf16.msra.mxu0 %v222
    %255 = vmatprep.subr.bf16.mxu0 0
    %256 = vmatpush1.bf16.msra.mxu0 %v221
    %257 = vmatprep.subr.bf16.mxu0 0
    %258 = vmatpush1.bf16.msra.mxu0 %v220
    %259 = vmatprep.subr.bf16.mxu0 0
    %260 = vmatpush1.bf16.msra.mxu0 %v219
    %261 = vmatprep.subr.bf16.mxu0 0
    %262 = vmatpush1.bf16.msra.mxu0 %v218
    %263 = vmatprep.subr.bf16.mxu0 0
    %264 = vmatpush1.bf16.msra.mxu0 %v217
    %265 = vmatprep.subr.bf16.mxu0 0
    %266 = vmatpush2.bf16.msra.mxu0 %v232
    %267 = vmatprep.subr.bf16.mxu0 0
    %268 = vmatpush2.bf16.msra.mxu0 %v231
    %269 = vmatprep.subr.bf16.mxu0 0
    %270 = vmatpush2.bf16.msra.mxu0 %v230
    %271 = vmatprep.subr.bf16.mxu0 0
    %272 = vmatpush2.bf16.msra.mxu0 %v229
    %273 = vmatprep.subr.bf16.mxu0 0
    %274 = vmatpush2.bf16.msra.mxu0 %v228
    %275 = vmatprep.subr.bf16.mxu0 0
    %276 = vmatpush2.bf16.msra.mxu0 %v227
    %277 = vmatprep.subr.bf16.mxu0 0
    %278 = vmatpush2.bf16.msra.mxu0 %v226
    %279 = vmatprep.subr.bf16.mxu0 0
    %280 = vmatpush2.bf16.msra.mxu0 %v225
    %281 = vmatprep.mubr.bf16.mxu0 %v152
    %282 = vmatmul.mubr.bf16.gmra.mxu0 %v151
    %v283 = vpop.f32.mrf.mxu0
    %v284 = vadd.f32 0.0, %v283
    %v285 = vpop.f32.mrf.mxu0
    %v286 = vpop.f32.mrf.mxu0
    %v287 = vadd.f32 0.0, %v286
    %v288 = vpop.f32.mrf.mxu0
    %289 = vdwg.mxu0
    %290 = vadd.xlane.f32.xlu0 %v284
    %v291 = vpop.xlane.xlu0 %290
    %292 = vadd.xlane.f32.xlu0 %v287
    %v293 = vpop.xlane.xlu0 %292
    %v294 = vmul.f32 %v284, %v284
    %v295 = vmul.f32 %v287, %v287
    %296 = vadd.xlane.f32.xlu0 %v294
    %v297 = vpop.xlane.xlu0 %296
    %298 = vadd.xlane.f32.xlu0 %v295
    %v299 = vpop.xlane.xlu0 %298
    %v300 = vmul.f32 %v291, 0.0078125
    %v301 = vmul.f32 %v293, 0.0078125
    %v302 = vmul.f32 %v297, 0.0078125
    %v303 = vmul.f32 %v299, 0.0078125
    %v304 = vmul.f32 %v300, %v300
    %v305 = vmul.f32 %v301, %v301
    %v306 = vsub.f32 %v302, %v304
    %v307 = vsub.f32 %v303, %v305
    %v308 = vmax.f32 %v306, 0.0
    %v309 = vmax.f32 %v307, 0.0
    %v310 = vsub.f32 %v284, %v300
    %v311 = vsub.f32 %v287, %v301
    %v312 = vadd.f32 %v308, 1e-05
    %v313 = vadd.f32 %v309, 1e-05
    %v314 = vrsqrt.pop %v312
    %v315 = vrsqrt.pop %v313
    %v316 = vmul.f32 %v310, %v314
    %v317 = vmul.f32 %v311, %v315
    %v318 = vld [vmem:[%s3] sm:$0x1]
    %v320 = vlaneseq
    %v321 = vshrl.u32 %v320, 7
    %v322 = vsub.s32 0, %v321
    %v323 = vrot.slane %v318, %v322
    %v325 = vmul.f32 %v316, %v323
    %v326 = vmul.f32 %v317, %v323
    %v327 = vld [vmem:[%s4] sm:$0x1]
    %v329 = vlaneseq
    %v330 = vshrl.u32 %v329, 7
    %v331 = vsub.s32 0, %v330
    %v332 = vrot.slane %v327, %v331
    %v334 = vadd.f32 %v325, %v332
    %v335 = vadd.f32 %v326, %v332
    %336 = vst [vmem:[#allocation5] sm:$0xff] %v334
    %337 = vst [vmem:[#allocation5 + $0x8] sm:$0xff] %v335
    // Predicated region
    $region26: #{tpu_custom_call.1} parent=1 // pred_check
      _
    $region27: #{tpu_custom_call.1} parent=1 // pred_check_branch
      %339 = sbr.rel (0) target = $region29
    $region28: #{tpu_custom_call.1} parent=1 // pred_region
      %s341 = ssub.s32 256, 256
      %342 = vsyncadd [#allocation4], %s341
      %s343 = sshll.u32 [#allocation5], 4
      %s344 = int_to_ptr.vmem [resolvable:$true] %s343
      %349 = dma.vmem_to_hbm [thread:$0]  %s344, 256, %s5, [#allocation4], 128, 128, 8
    $region29: #{tpu_custom_call.1} parent=1 // pred_fallthru
      _
    // Predicated region
    $region30: #{tpu_custom_call.1} parent=1 // pred_check
      _
    $region31: #{tpu_custom_call.1} parent=1 // pred_check_branch
      %351 = sbr.rel (0) target = $region33
    $region32: #{tpu_custom_call.1} parent=1 // pred_region
      %352 = dma.done [#allocation4], 256
    $region33: #{tpu_custom_call.1} parent=1 // pred_fallthru
      _
    %353 = vsyncpa [#allocation3], 1
    %354 = vsyncpa [#allocation4], 1

</llo_original>
